<compile_context>
chip_gen: v7x
topology: tpu7x:2x2x1
jax: 0.10.0
libtpu: 0.0.40
codegen_flags: <defaults>
</compile_context>

<pallas_src>
import numpy as np
import jax
import jax.numpy as jnp
from jax.experimental import pallas as pl
from jax.experimental.pallas import tpu as pltpu


# ----------------------------------------------------------------------------
# Pallas kernel: one pure MXU matmul per (all-rows) x (column-tile) slab.
# ----------------------------------------------------------------------------
def _tps_kernel(theta_ref, m_ref, out_ref):
    # theta_ref : (B, 2N+1)   rows = [theta_x | theta_y | 1]
    # m_ref     : (2N+1, TP)  column tile of the folded, xy-interleaved constant
    # out_ref   : (B, TP)     lane-dense, x/y interleaved warped coordinates
    out_ref[...] = jnp.dot(theta_ref[...], m_ref[...],
                           preferred_element_type=jnp.float32)


def _round_up(x, m):
    return ((x + m - 1) // m) * m


# ----------------------------------------------------------------------------
# Constant setup (mirrors TpsGridGen.__init__, with the full constant fold)
# ----------------------------------------------------------------------------
def build_tps_constants(grid_size=5, out_hight=16, out_weight=16,
                        max_col_tile=4096):
    N = grid_size ** 2
    axis = np.linspace(-1.0, 1.0, grid_size).astype(np.float32)
    p_y_g, p_x_g = np.meshgrid(axis, axis, indexing="ij")
    p_x = p_x_g.reshape(-1).astype(np.float32)            # varies fast
    p_y = p_y_g.reshape(-1).astype(np.float32)            # varies slow

    # L^{-1}  (standard TPS system; see TODO note at top of file).
    d2 = (p_x[:, None] - p_x[None, :]) ** 2 + (p_y[:, None] - p_y[None, :]) ** 2
    d2 = d2.astype(np.float64)
    d2[d2 == 0.0] = 1.0
    K = d2 * np.log(d2)
    Pm = np.stack([np.ones(N, np.float64), p_x.astype(np.float64),
                   p_y.astype(np.float64)], axis=1)                    # (N, 3)
    L = np.block([[K, Pm], [Pm.T, np.zeros((3, 3), np.float64)]])
    Li = np.linalg.inv(L).astype(np.float32)                           # (N+3, N+3)

    # Output sampling grid (torch: meshgrid(linspace(W), linspace(H), 'ij')).
    gx_lin = np.linspace(-1.0, 1.0, out_weight).astype(np.float32)
    gy_lin = np.linspace(-1.0, 1.0, out_hight).astype(np.float32)
    gx, gy = np.meshgrid(gx_lin, gy_lin, indexing="ij")                # (W, H)
    gxf = gx.reshape(-1)                                               # (P,)
    gyf = gy.reshape(-1)                                               # (P,)
    P = gxf.shape[0]

    # Radial-basis matrix U (N, P).  NOTE: the p_y == p_x module bug is kept:
    # both distance components use the control-point x-coordinates.
    du2 = (gxf[None, :] - p_x[:, None]) ** 2 + (gyf[None, :] - p_x[:, None]) ** 2
    du2[du2 == 0.0] = 1.0
    U = du2 * np.log(du2)                                              # (N, P)

    # Constant fold: M = Li[:, :N].T @ [U ; 1 ; gx ; gy]    -> (N, P)
    U_aug = np.concatenate(
        [U, np.ones((1, P), np.float32), gxf[None, :], gyf[None, :]], axis=0)
    M64 = Li[:, :N].astype(np.float64).T @ U_aug.astype(np.float64)    # (N, P)
    c_x = p_x.astype(np.float64) @ M64        # (P,)  control-point x offset folded in
    c_y = p_y.astype(np.float64) @ M64        # (P,)  control-point y offset folded in

    # xy-interleaved constant:  out[b, 2p] = x'(b,p),  out[b, 2p+1] = y'(b,p).
    # Rows: [theta_x weights | theta_y weights | bias row (p_x/p_y fold)].
    P2 = 2 * P
    p2_pad = _round_up(P2, 128)               # lane-dense output columns
    col_tile = min(p2_pad, max_col_tile)
    while p2_pad % col_tile:                  # keep a multiple-of-128 divisor
        col_tile -= 128
    Kdim = 2 * N + 1
    M_big = np.zeros((Kdim, p2_pad), np.float32)
    M_big[0:N, 0:P2:2] = M64.astype(np.float32)
    M_big[N:2 * N, 1:P2:2] = M64.astype(np.float32)
    M_big[2 * N, 0:P2:2] = c_x.astype(np.float32)
    M_big[2 * N, 1:P2:2] = c_y.astype(np.float32)

    return dict(
        N=N, out_w=out_weight, out_h=out_hight,
        p2=P2, p2_pad=p2_pad, col_tile=col_tile,
        m_big=jnp.asarray(M_big),                                      # (2N+1, p2_pad)
        _np=dict(Li=Li, p_x=p_x, p_y=p_y, gx=gxf, gy=gyf),
    )


def tps_grid_gen(theta, consts):
    """theta: [B, 2N] float32 -> warped grid [B, out_weight, out_hight, 2]."""
    N, W, H = consts["N"], consts["out_w"], consts["out_h"]
    P2, p2_pad, TP = consts["p2"], consts["p2_pad"], consts["col_tile"]
    Kdim = 2 * N + 1
    B = theta.shape[0]

    # Fold control-point offsets into the matmul: a constant-1 column selects
    # the precomputed bias row of m_big.  (Tiny concat; replaces jnp.tile(pb).)
    theta_aug = jnp.concatenate(
        [theta.astype(jnp.float32), jnp.ones((B, 1), jnp.float32)], axis=1)

    grid = (p2_pad // TP,)     # 1 step at the default size; many at production P

    out = pl.pallas_call(
        _tps_kernel,
        out_shape=jax.ShapeDtypeStruct((B, p2_pad), jnp.float32),
        grid=grid,
        in_specs=[
            pl.BlockSpec((B, Kdim), lambda j: (0, 0)),     # theta rows (resident, tiny)
            pl.BlockSpec((Kdim, TP), lambda j: (0, j)),    # constant column tile
        ],
        out_specs=pl.BlockSpec((B, TP), lambda j: (0, j)),
        compiler_params=pltpu.CompilerParams(
            dimension_semantics=("parallel",)),
    )(theta_aug, consts["m_big"])

    if p2_pad != P2:
        out = out[:, :P2]                      # drop lane padding (contiguous prefix)
    # Lane-interleaved (x, y): channels-last layout falls out of a pure reshape.
    return out.reshape(B, W, H, 2)


# ----------------------------------------------------------------------------
# Pure-numpy reference (faithful to the torch forward path, incl. the p_y bug)
# ----------------------------------------------------------------------------
def tps_ref_np(theta, consts):
    c = consts["_np"]
    N = consts["N"]
    Li, p_x, p_y = c["Li"], c["p_x"], c["p_y"]
    gx, gy = c["gx"], c["gy"]
    Qx = theta[:, :N] + p_x[None, :]
    Qy = theta[:, N:] + p_y[None, :]
    Wx = Qx @ Li[:N, :N].T
    Wy = Qy @ Li[:N, :N].T
    Ax = Qx @ Li[N:, :N].T
    Ay = Qy @ Li[N:, :N].T
    d2 = (gx[:, None] - p_x[None, :]) ** 2 + (gy[:, None] - p_x[None, :]) ** 2  # p_y bug
    d2[d2 == 0.0] = 1.0
    U = d2 * np.log(d2)                                    # (P, N)
    xp = Ax[:, 0:1] + Ax[:, 1:2] * gx[None, :] + Ax[:, 2:3] * gy[None, :] + Wx @ U.T
    yp = Ay[:, 0:1] + Ay[:, 1:2] * gx[None, :] + Ay[:, 2:3] * gy[None, :] + Wy @ U.T
    B = theta.shape[0]
    W, H = consts["out_w"], consts["out_h"]
    return np.stack([xp, yp], axis=1).reshape(B, 2, W, H).transpose(0, 2, 3, 1)


if __name__ == "__main__":
    grid_size = 5
    out_hight, out_weight = 16, 16          # small spatial size (P = W*H = 256)
    batch = 2

    consts = build_tps_constants(grid_size, out_hight, out_weight)
    N = consts["N"]

    key = jax.random.PRNGKey(0)
    theta = 0.1 * jax.random.normal(key, (batch, 2 * N), dtype=jnp.float32)

    warped = tps_grid_gen(theta, consts)
    warped = jax.block_until_ready(warped)

    ref = tps_ref_np(np.asarray(theta, dtype=np.float32), consts)
    assert warped.shape == (batch, out_weight, out_hight, 2), warped.shape
    # Constant folding changes the f32 summation order slightly vs the
    # unfused reference path; allow a small absolute slack.
    np.testing.assert_allclose(np.asarray(warped), ref, rtol=1e-4, atol=5e-4)
    print("KERNEL_OK")
</pallas_src>

<mosaic_0001>
module attributes {stable_mosaic.version = 11 : i64} {
  func.func @_tps_kernel(%arg0: i32, %arg1: memref<2x51xf32, #tpu.memory_space<vmem>>, %arg2: memref<51x512xf32, #tpu.memory_space<vmem>>, %arg3: memref<2x512xf32, #tpu.memory_space<vmem>>) attributes {dimension_semantics = [#tpu.dimension_semantics<parallel>], iteration_bounds = array<i64: 1>, scalar_prefetch = 0 : i64, scratch_operands = 0 : i64, tpu.core_type = #tpu.core_type<tc>, window_params = [{pipeline_mode = #tpu.pipeline_mode<synchronous>, transform_indices = @transform_0, window_bounds = array<i64: 2, 51>}, {transform_indices = @transform_1, window_bounds = array<i64: 51, 512>}, {transform_indices = @transform_2, window_bounds = array<i64: 2, 512>}]} {
    %c0 = arith.constant 0 : index
    %c0_0 = arith.constant 0 : index
    %0 = vector.load %arg1[%c0, %c0_0] : memref<2x51xf32, #tpu.memory_space<vmem>>, vector<2x51xf32>
    %c0_1 = arith.constant 0 : index
    %c0_2 = arith.constant 0 : index
    %1 = vector.load %arg2[%c0_1, %c0_2] : memref<51x512xf32, #tpu.memory_space<vmem>>, vector<51x512xf32>
    %cst = arith.constant dense<0.000000e+00> : vector<2x512xf32>
    %2 = tpu.matmul %0, %1, %cst {dimension_numbers = #tpu.dot_dimension_numbers<[1], [0], [0], [1], [0, 0, 1, 1], [], []>} : vector<2x51xf32>, vector<51x512xf32>, vector<2x512xf32> -> vector<2x512xf32>
    %c0_3 = arith.constant 0 : index
    %c0_4 = arith.constant 0 : index
    %3 = vector.load %arg3[%c0_3, %c0_4] : memref<2x512xf32, #tpu.memory_space<vmem>>, vector<2x512xf32>
    tpu.vector_store %arg3[%c0_3, %c0_4], %2 {strides = array<i32>} : memref<2x512xf32, #tpu.memory_space<vmem>>, vector<2x512xf32>,
    return
  }
  func.func @transform_0(%arg0: i32) -> (i32, i32) {
    %c0_i32 = arith.constant 0 : i32
    %c0_i32_0 = arith.constant 0 : i32
    %c0_i32_1 = arith.constant 0 : i32
    return %c0_i32, %c0_i32_0 : i32, i32
  }
  func.func @transform_1(%arg0: i32) -> (i32, i32) {
    %c0_i32 = arith.constant 0 : i32
    %c0_i32_0 = arith.constant 0 : i32
    return %c0_i32, %arg0 : i32, i32
  }
  func.func @transform_2(%arg0: i32) -> (i32, i32) {
    %c0_i32 = arith.constant 0 : i32
    %c0_i32_0 = arith.constant 0 : i32
    return %c0_i32, %arg0 : i32, i32
  }
}

</mosaic_0001>

<llo_original>
// kernel: tpu_custom_call.1
$region0: #{tpu_custom_call.1}
  #allocation0 [shape = 'u32[]', space=smem, size = 0x4, offset = 0x4, fixed_abs, tag = 'smem constant byte address 0x4 - core index']
  #allocation1 [shape = 'u32[144,128]{1,0:T(1,128)}', space=vmem, size = 0x12000, scoped, tag = 'internal scratch']
  %s0 = inlined_call_operand.hbm [shape: f32[2,51], index: 0, kind: input, shape index: {}]
  %s1 = inlined_call_operand.hbm [shape: f32[51,512], index: 1, kind: input, shape index: {}]
  %s2 = inlined_call_operand.hbm [shape: f32[2,512], index: 2, kind: output, shape index: {}]
  %s3 = sld [smem:[#allocation0]]
  $region26: #{tpu_custom_call.1} parent=0
    _
  %s5 = ssub.s32 1, %s3
  %s6 = scalar_select 0, %s5, %s3
  $region1: #{tpu_custom_call.1} parent=0
    #allocation2 [shape = 'u8[1024]{0}', space=vmem, size = 0x400, scoped, tag = 'input window, operand 0, single buffered']
    #allocation3 [shape = 's32[1]{0}', space=sflag, size = 0x4, scoped, tag = 'scoped memory for tpu_custom_call.1']
    #allocation4 [shape = 's32[1]{0}', space=sflag, size = 0x4, scoped, tag = 'scoped memory for tpu_custom_call.1']
    #allocation5 [shape = 'u8[114688]{0}', space=vmem, size = 0x1c000, scoped, tag = 'input window, operand 1, single buffered']
    #allocation6 [shape = 's32[1]{0}', space=sflag, size = 0x4, scoped, tag = 'scoped memory for tpu_custom_call.1']
    #allocation7 [shape = 'u8[4096]{0}', space=vmem, size = 0x1000, scoped, tag = 'output window, operand 0, single buffered']
    %7 = vsyncpa [#allocation3], 0
    %8 = vsyncpa [#allocation6], 0
    %9 = vsyncpa [#allocation4], 0
    // Predicated region
    $region2: #{tpu_custom_call.1} parent=1 // pred_check
      _
    $region3: #{tpu_custom_call.1} parent=1 // pred_check_branch
      %11 = sbr.rel (0) target = $region5
    $region4: #{tpu_custom_call.1} parent=1 // pred_region
      %s13 = ssub.s32 32, 32
      %14 = vsyncadd [#allocation3], %s13
      %s16 = sshll.u32 [#allocation2], 4
      %s17 = int_to_ptr.vmem [resolvable:$true] %s16
      %19 = dma.hbm_to_vmem [thread:$0]  %s0, 32, %s17, [#allocation3]
    $region5: #{tpu_custom_call.1} parent=1 // pred_fallthru
      _
    // Predicated region
    $region6: #{tpu_custom_call.1} parent=1 // pred_check
      _
    $region7: #{tpu_custom_call.1} parent=1 // pred_check_branch
      %21 = sbr.rel (0) target = $region9
    $region8: #{tpu_custom_call.1} parent=1 // pred_region
      %s23 = ssub.s32 3584, 3584
      %24 = vsyncadd [#allocation6], %s23
      %s25 = sshll.u32 [#allocation5], 4
      %s26 = int_to_ptr.vmem [resolvable:$true] %s25
      %31 = dma.hbm_to_vmem [thread:$0]  %s1, 3584, %s26, [#allocation6], 512, 512, 32
    $region9: #{tpu_custom_call.1} parent=1 // pred_fallthru
      _
    // Predicated region
    $region10: #{tpu_custom_call.1} parent=1 // pred_check
      _
    $region11: #{tpu_custom_call.1} parent=1 // pred_check_branch
      %33 = sbr.rel (0) target = $region13
    $region12: #{tpu_custom_call.1} parent=1 // pred_region
      %34 = dma.done [#allocation3], 32
    $region13: #{tpu_custom_call.1} parent=1 // pred_fallthru
      _
    // Predicated region
    $region14: #{tpu_custom_call.1} parent=1 // pred_check
      _
    $region15: #{tpu_custom_call.1} parent=1 // pred_check_branch
      %36 = sbr.rel (0) target = $region17
    $region16: #{tpu_custom_call.1} parent=1 // pred_region
      %37 = dma.done [#allocation6], 3584
    $region17: #{tpu_custom_call.1} parent=1 // pred_fallthru
      _
    %v38 = vld [vmem:[#allocation2] sm:$0x3]
    %v39 = vld [vmem:[#allocation5] sm:$0xff]
    %v40 = vld [vmem:[#allocation5 + $0x8] sm:$0xff]
    %v41 = vld [vmem:[#allocation5 + $0x10] sm:$0xff]
    %v42 = vld [vmem:[#allocation5 + $0x18] sm:$0xff]
    %v43 = vld [vmem:[#allocation5 + $0x20] sm:$0xff]
    %v44 = vld [vmem:[#allocation5 + $0x28] sm:$0xff]
    %v45 = vld [vmem:[#allocation5 + $0x30] sm:$0xff]
    %v46 = vld [vmem:[#allocation5 + $0x38] sm:$0xff]
    %v47 = vld [vmem:[#allocation5 + $0x40] sm:$0xff]
    %v48 = vld [vmem:[#allocation5 + $0x48] sm:$0xff]
    %v49 = vld [vmem:[#allocation5 + $0x50] sm:$0xff]
    %v50 = vld [vmem:[#allocation5 + $0x58] sm:$0xff]
    %v51 = vld [vmem:[#allocation5 + $0x60] sm:$0xff]
    %v52 = vld [vmem:[#allocation5 + $0x68] sm:$0xff]
    %v53 = vld [vmem:[#allocation5 + $0x70] sm:$0xff]
    %v54 = vld [vmem:[#allocation5 + $0x78] sm:$0xff]
    %v55 = vld [vmem:[#allocation5 + $0x80] sm:$0xff]
    %v56 = vld [vmem:[#allocation5 + $0x88] sm:$0xff]
    %v57 = vld [vmem:[#allocation5 + $0x90] sm:$0xff]
    %v58 = vld [vmem:[#allocation5 + $0x98] sm:$0xff]
    %v59 = vld [vmem:[#allocation5 + $0xa0] sm:$0xff]
    %v60 = vld [vmem:[#allocation5 + $0xa8] sm:$0xff]
    %v61 = vld [vmem:[#allocation5 + $0xb0] sm:$0xff]
    %v62 = vld [vmem:[#allocation5 + $0xb8] sm:$0xff]
    %v63 = vld [vmem:[#allocation5 + $0xc0] sm:$0x7]
    %v64 = vld [vmem:[#allocation5 + $0xc8] sm:$0x7]
    %v65 = vld [vmem:[#allocation5 + $0xd0] sm:$0x7]
    %v66 = vld [vmem:[#allocation5 + $0xd8] sm:$0x7]
    %vm67 = vcmask 416768
    %v69 = vsel %vm67, %v38, 0
    %vm71 = vcmask 1042432
    %v73 = vsel %vm71, %v63, 0
    %v76 = vsel %vm71, %v64, 0
    %v79 = vsel %vm71, %v65, 0
    %v82 = vsel %vm71, %v66, 0
    %84 = vmatprep.subr.mxu0 %v40
    %85 = vmatpush1.msra.mxu0 %v39
    %86 = vmatprep.subr.mxu0 %v44
    %87 = vmatpush1.msra.mxu0 %v43
    %88 = vmatprep.subr.mxu0 %v48
    %89 = vmatpush1.msra.mxu0 %v47
    %90 = vmatprep.subr.mxu0 %v52
    %91 = vmatpush1.msra.mxu0 %v51
    %92 = vmatprep.subr.mxu0 %v56
    %93 = vmatpush1.msra.mxu0 %v55
    %94 = vmatprep.subr.mxu0 %v60
    %95 = vmatpush1.msra.mxu0 %v59
    %96 = vmatprep.subr.mxu0 %v76
    %97 = vmatpush1.msra.mxu0 %v73
    %98 = vmatprep.subr.mxu0 0.0
    %99 = vmatpush1.msra.mxu0 0.0
    %100 = vmatprep.subr.mxu0 0.0
    %101 = vmatpush1.msra.mxu0 0.0
    %102 = vmatprep.subr.mxu0 0.0
    %103 = vmatpush1.msra.mxu0 0.0
    %104 = vmatprep.subr.mxu0 0.0
    %105 = vmatpush1.msra.mxu0 0.0
    %106 = vmatprep.subr.mxu0 0.0
    %107 = vmatpush1.msra.mxu0 0.0
    %108 = vmatprep.subr.mxu0 0.0
    %109 = vmatpush1.msra.mxu0 0.0
    %110 = vmatprep.subr.mxu0 0.0
    %111 = vmatpush1.msra.mxu0 0.0
    %112 = vmatprep.subr.mxu0 0.0
    %113 = vmatpush1.msra.mxu0 0.0
    %114 = vmatprep.subr.mxu0 0.0
    %115 = vmatpush1.msra.mxu0 0.0
    %116 = vmatprep.subr.mxu0 0.0
    %117 = vmatpush1.msra.mxu0 0.0
    %118 = vmatprep.subr.mxu0 0.0
    %119 = vmatpush1.msra.mxu0 0.0
    %120 = vmatprep.subr.mxu0 0.0
    %121 = vmatpush1.msra.mxu0 0.0
    %122 = vmatprep.subr.mxu0 0.0
    %123 = vmatpush1.msra.mxu0 0.0
    %124 = vmatprep.subr.mxu0 0.0
    %125 = vmatpush1.msra.mxu0 0.0
    %126 = vmatprep.subr.mxu0 0.0
    %127 = vmatpush1.msra.mxu0 0.0
    %128 = vmatprep.subr.mxu0 0.0
    %129 = vmatpush1.msra.mxu0 0.0
    %130 = vmatprep.subr.mxu0 0.0
    %131 = vmatpush1.msra.mxu0 0.0
    %132 = vmatprep.subr.mxu0 0.0
    %133 = vmatpush1.msra.mxu0 0.0
    %134 = vmatprep.subr.mxu0 0.0
    %135 = vmatpush1.msra.mxu0 0.0
    %136 = vmatprep.subr.mxu0 0.0
    %137 = vmatpush1.msra.mxu0 0.0
    %138 = vmatprep.subr.mxu0 0.0
    %139 = vmatpush1.msra.mxu0 0.0
    %140 = vmatprep.subr.mxu0 0.0
    %141 = vmatpush1.msra.mxu0 0.0
    %142 = vmatprep.subr.mxu0 0.0
    %143 = vmatpush1.msra.mxu0 0.0
    %144 = vmatprep.subr.mxu0 0.0
    %145 = vmatpush1.msra.mxu0 0.0
    %146 = vmatprep.subr.mxu0 0.0
    %147 = vmatpush1.msra.mxu0 0.0
    %148 = vmatprep.mubr.f32.mxu0 0.0
    %149 = vmatmul.mubr.f32.gmra.mrb[0].mxu0 %v69
    %v150 = vpop.f32.mrb[0].mxu0
    %v151 = vadd.f32 0.0, %v150
    %v152 = vpop.f32.mrb[0].mxu0
    %v153 = vadd.f32 0.0, %v152
    %154 = vdwg.mxu0
    %155 = vmatprep.subr.mxu0 %v42
    %156 = vmatpush1.msra.mxu0 %v41
    %157 = vmatprep.subr.mxu0 %v46
    %158 = vmatpush1.msra.mxu0 %v45
    %159 = vmatprep.subr.mxu0 %v50
    %160 = vmatpush1.msra.mxu0 %v49
    %161 = vmatprep.subr.mxu0 %v54
    %162 = vmatpush1.msra.mxu0 %v53
    %163 = vmatprep.subr.mxu0 %v58
    %164 = vmatpush1.msra.mxu0 %v57
    %165 = vmatprep.subr.mxu0 %v62
    %166 = vmatpush1.msra.mxu0 %v61
    %167 = vmatprep.subr.mxu0 %v82
    %168 = vmatpush1.msra.mxu0 %v79
    %169 = vmatprep.subr.mxu0 0.0
    %170 = vmatpush1.msra.mxu0 0.0
    %171 = vmatprep.subr.mxu0 0.0
    %172 = vmatpush1.msra.mxu0 0.0
    %173 = vmatprep.subr.mxu0 0.0
    %174 = vmatpush1.msra.mxu0 0.0
    %175 = vmatprep.subr.mxu0 0.0
    %176 = vmatpush1.msra.mxu0 0.0
    %177 = vmatprep.subr.mxu0 0.0
    %178 = vmatpush1.msra.mxu0 0.0
    %179 = vmatprep.subr.mxu0 0.0
    %180 = vmatpush1.msra.mxu0 0.0
    %181 = vmatprep.subr.mxu0 0.0
    %182 = vmatpush1.msra.mxu0 0.0
    %183 = vmatprep.subr.mxu0 0.0
    %184 = vmatpush1.msra.mxu0 0.0
    %185 = vmatprep.subr.mxu0 0.0
    %186 = vmatpush1.msra.mxu0 0.0
    %187 = vmatprep.subr.mxu0 0.0
    %188 = vmatpush1.msra.mxu0 0.0
    %189 = vmatprep.subr.mxu0 0.0
    %190 = vmatpush1.msra.mxu0 0.0
    %191 = vmatprep.subr.mxu0 0.0
    %192 = vmatpush1.msra.mxu0 0.0
    %193 = vmatprep.subr.mxu0 0.0
    %194 = vmatpush1.msra.mxu0 0.0
    %195 = vmatprep.subr.mxu0 0.0
    %196 = vmatpush1.msra.mxu0 0.0
    %197 = vmatprep.subr.mxu0 0.0
    %198 = vmatpush1.msra.mxu0 0.0
    %199 = vmatprep.subr.mxu0 0.0
    %200 = vmatpush1.msra.mxu0 0.0
    %201 = vmatprep.subr.mxu0 0.0
    %202 = vmatpush1.msra.mxu0 0.0
    %203 = vmatprep.subr.mxu0 0.0
    %204 = vmatpush1.msra.mxu0 0.0
    %205 = vmatprep.subr.mxu0 0.0
    %206 = vmatpush1.msra.mxu0 0.0
    %207 = vmatprep.subr.mxu0 0.0
    %208 = vmatpush1.msra.mxu0 0.0
    %209 = vmatprep.subr.mxu0 0.0
    %210 = vmatpush1.msra.mxu0 0.0
    %211 = vmatprep.subr.mxu0 0.0
    %212 = vmatpush1.msra.mxu0 0.0
    %213 = vmatprep.subr.mxu0 0.0
    %214 = vmatpush1.msra.mxu0 0.0
    %215 = vmatprep.subr.mxu0 0.0
    %216 = vmatpush1.msra.mxu0 0.0
    %217 = vmatprep.subr.mxu0 0.0
    %218 = vmatpush1.msra.mxu0 0.0
    %219 = vmatprep.mubr.f32.mxu0 0.0
    %220 = vmatmul.mubr.f32.gmra.mrb[0].mxu0 %v69
    %v221 = vpop.f32.mrb[0].mxu0
    %v222 = vadd.f32 0.0, %v221
    %v223 = vpop.f32.mrb[0].mxu0
    %v224 = vadd.f32 0.0, %v223
    %225 = vdwg.mxu0
    %v230 = vcombine.low %v151, %v153
    %v231 = vcombine.low %v222, %v224
    %v233 = vunpack.c.l.s4 1983009808
    %v234 = vunpack.c.0.s8 %v233
    %v235 = vlaneseq
    %v236 = vshrl.u32 %v235, 7
    %v237 = vsub.s32 %v234, %v236
    %v238 = vrot.slane %v230, %v237
    %v240 = vunpack.c.l.s4 1983009808
    %v241 = vunpack.c.0.s8 %v240
    %v242 = vlaneseq
    %v243 = vshrl.u32 %v242, 7
    %v244 = vsub.s32 %v241, %v243
    %v245 = vrot.slane %v231, %v244
    %v246 = vcombine.low %v238, %v245
    %248 = vst [vmem:[#allocation7] sm:$0xff] %v246
    // Predicated region
    $region18: #{tpu_custom_call.1} parent=1 // pred_check
      _
    $region19: #{tpu_custom_call.1} parent=1 // pred_check_branch
      %250 = sbr.rel (0) target = $region21
    $region20: #{tpu_custom_call.1} parent=1 // pred_region
      %s252 = ssub.s32 128, 128
      %253 = vsyncadd [#allocation4], %s252
      %s255 = sshll.u32 [#allocation7], 4
      %s256 = int_to_ptr.vmem [resolvable:$true] %s255
      %258 = dma.vmem_to_hbm [thread:$0]  %s256, 128, %s2, [#allocation4]
    $region21: #{tpu_custom_call.1} parent=1 // pred_fallthru
      _
    // Predicated region
    $region22: #{tpu_custom_call.1} parent=1 // pred_check
      _
    $region23: #{tpu_custom_call.1} parent=1 // pred_check_branch
      %260 = sbr.rel (0) target = $region25
    $region24: #{tpu_custom_call.1} parent=1 // pred_region
      %261 = dma.done [#allocation4], 128
    $region25: #{tpu_custom_call.1} parent=1 // pred_fallthru
      _
    %262 = vsyncpa [#allocation3], 1
    %263 = vsyncpa [#allocation6], 1
    %264 = vsyncpa [#allocation4], 1

</llo_original>
